<compile_context>
chip_gen: v7x
topology: tpu7x:2x2x1
jax: 0.10.0
libtpu: 0.0.40
codegen_flags: <defaults>
</compile_context>

<pallas_src>
import math

import jax
import jax.numpy as jnp
from jax.experimental import pallas as pl
from jax.experimental.pallas import tpu as pltpu

_INV_SQRT2 = 1.0 / math.sqrt(2.0)


def _round_up(x, m):
    return ((x + m - 1) // m) * m


def _gelu_f32(h):
    # Exact erf-based GELU — matches torch.nn.GELU() default.  f32 epilogue
    # (erf runs on the EUP slot, essentially free next to the MXU work).
    return 0.5 * h * (1.0 + jax.lax.erf(h * _INV_SQRT2))


# --------------- resident-weights kernel: 1-D grid over row tiles ------------
def _mlp_kernel_resident(x_ref, w1_ref, b1_ref, w2_ref, b2_ref, o_ref):
    h = jnp.dot(x_ref[...], w1_ref[...],
                preferred_element_type=jnp.float32) + b1_ref[...]
    h = _gelu_f32(h)
    # dropout(p=0.0) is identity.
    o_ref[...] = (jnp.dot(h.astype(w2_ref.dtype), w2_ref[...],
                          preferred_element_type=jnp.float32)
                  + b2_ref[...]).astype(o_ref.dtype)


# --------------- streaming kernel: 2-D grid (row tiles, hidden chunks) -------
def _mlp_kernel_stream(x_ref, w1_ref, b1_ref, w2_ref, b2_ref, o_ref, acc_ref):
    k = pl.program_id(1)

    @pl.when(k == 0)
    def _init():
        acc_ref[...] = jnp.zeros_like(acc_ref)

    h = jnp.dot(x_ref[...], w1_ref[...],
                preferred_element_type=jnp.float32) + b1_ref[...]
    h = _gelu_f32(h)
    acc_ref[...] += jnp.dot(h.astype(w2_ref.dtype), w2_ref[...],
                            preferred_element_type=jnp.float32)

    @pl.when(k == pl.num_programs(1) - 1)
    def _finalize():
        o_ref[...] = (acc_ref[...] + b2_ref[...]).astype(o_ref.dtype)


def _vmem_budget_bytes():
    cap = 64 * 1024 * 1024  # conservative fallback (v7x per-TC VMEM)
    try:
        info = pltpu.get_tpu_info()
        c = int(getattr(info, "vmem_capacity_bytes", cap))
        if c > 0:
            cap = c
    except Exception:
        pass
    # Leave headroom for Mosaic's internal scratch / semaphores:
    # ~48 MiB on 64 MiB parts (v7x), ~96 MiB on 128 MiB parts (v5e/v6e).
    return (cap * 3) // 4


def _pick_tm(m_sub, tm_target, sublane):
    """Row tile: sublane multiple <= target; prefer one dividing m_sub (little
    or no padding) and keep >= 2 row tiles when possible (v7x megacore)."""
    tm_cap = min(tm_target, m_sub)
    if tm_cap >= m_sub and m_sub > sublane:
        tm_cap = max(sublane, _round_up(m_sub // 2, sublane))
    tm_cap = max(sublane, (tm_cap // sublane) * sublane)
    best = tm_cap
    t = tm_cap
    while t >= max(sublane, tm_cap // 2):
        if m_sub % t == 0:
            best = t
            break
        t -= sublane
    return best


def _pad2(a, rows, cols):
    pr, pc = rows - a.shape[0], cols - a.shape[1]
    if pr == 0 and pc == 0:
        return a
    return jnp.pad(a, ((0, pr), (0, pc)))


def mlp_pallas(x, w1, b1, w2, b2, *, tm=256, th=None,
               compute_dtype=jnp.bfloat16, force_streaming=False):
    """x: (..., Din) -> (..., Dout).  w1: (Din, H), w2: (H, Dout)."""
    orig_shape = x.shape
    out_dtype = x.dtype
    d_in = orig_shape[-1]
    hidden = w1.shape[1]
    d_out = w2.shape[1]

    cdt = jnp.dtype(compute_dtype)
    odt = jnp.dtype(out_dtype)
    sub_req = {4: 8, 2: 16, 1: 32}
    sublane = max(sub_req.get(cdt.itemsize, 8), sub_req.get(odt.itemsize, 8))
    cb, ob = cdt.itemsize, odt.itemsize

    # ---- host-side layout plumbing: lane-align feature dims (exact — zero
    # padding contributes GELU(0) = 0 through fc2) and cast matmul operands.
    d_in_p = _round_up(d_in, 128)
    h_p = _round_up(hidden, 128)
    d_out_p = _round_up(d_out, 128)

    x2 = x.reshape(-1, d_in).astype(compute_dtype)
    m = x2.shape[0]
    x2 = _pad2(x2, m, d_in_p)

    w1p = _pad2(w1.astype(compute_dtype), d_in_p, h_p)
    w2p = _pad2(w2.astype(compute_dtype), h_p, d_out_p)
    b1p = _pad2(b1.astype(jnp.float32).reshape(1, -1), 1, h_p)
    b2p = _pad2(b2.astype(jnp.float32).reshape(1, -1), 1, d_out_p)

    budget = _vmem_budget_bytes()
    m_sub = _round_up(m, sublane)

    # ---------------- weights-resident path (preferred) ----------------------
    def resident_bytes(t):
        return (2 * cb * (d_in_p * h_p + h_p * d_out_p)       # w1, w2 (dbl-buf)
                + 2 * 4 * (h_p + d_out_p)                      # biases (f32)
                + 2 * (cb * t * d_in_p + ob * t * d_out_p)     # x / out blocks
                + 3 * 4 * t * h_p)                             # h + GELU temps

    use_resident = False
    tm_res = _pick_tm(m_sub, tm, sublane)
    if not force_streaming:
        t = tm_res
        while resident_bytes(t) > budget and t > max(sublane, 128):
            t = max(sublane, ((t // 2) // sublane) * sublane)
        if resident_bytes(t) <= budget:
            use_resident = True
            tm_res = t

    if use_resident:
        m_pad = _round_up(m_sub, tm_res)
        if m_pad != m:
            x2 = jnp.pad(x2, ((0, m_pad - m), (0, 0)))
        grid = (m_pad // tm_res,)

        flops = 2 * m_pad * h_p * (d_in_p + d_out_p)
        bytes_accessed = (cb * (m_pad * d_in_p + d_in_p * h_p + h_p * d_out_p)
                          + 4 * (h_p + d_out_p) + ob * m_pad * d_out_p)
        cost = pl.CostEstimate(flops=flops, transcendentals=m_pad * h_p,
                               bytes_accessed=bytes_accessed)

        out = pl.pallas_call(
            _mlp_kernel_resident,
            out_shape=jax.ShapeDtypeStruct((m_pad, d_out_p), out_dtype),
            grid_spec=pltpu.PrefetchScalarGridSpec(
                num_scalar_prefetch=0,
                grid=grid,
                in_specs=[
                    pl.BlockSpec((tm_res, d_in_p), lambda i: (i, 0)),   # x rows
                    pl.BlockSpec((d_in_p, h_p), lambda i: (0, 0)),      # w1 (resident)
                    pl.BlockSpec((1, h_p), lambda i: (0, 0)),           # b1
                    pl.BlockSpec((h_p, d_out_p), lambda i: (0, 0)),     # w2 (resident)
                    pl.BlockSpec((1, d_out_p), lambda i: (0, 0)),       # b2
                ],
                out_specs=pl.BlockSpec((tm_res, d_out_p), lambda i: (i, 0)),
            ),
            compiler_params=pltpu.CompilerParams(
                dimension_semantics=("parallel",),
                vmem_limit_bytes=int(budget)),
            cost_estimate=cost,
        )(x2, w1p, b1p, w2p, b2p)
    else:
        # ---------------- hidden-streaming fallback --------------------------
        # Bigger row tiles when streaming so weight bytes are amortized over
        # enough flops (>= ~655 flops/byte on v6e).
        tm_target_s = max(tm, 768 if cb <= 2 else 1024)
        tm_s = _pick_tm(m_sub, tm_target_s, sublane)

        if th is not None and th % 128 == 0 and h_p % th == 0:
            th_s = th
        else:
            th_s = h_p
            for cand in (1024, 512, 256, 128):   # prefer 256-multiples (MXU)
                if h_p % cand == 0:
                    th_s = cand
                    break

        def stream_bytes(t, c):
            return (2 * cb * (t * d_in_p + d_in_p * c + c * d_out_p)
                    + 2 * 4 * (c + d_out_p)
                    + 2 * ob * t * d_out_p
                    + 4 * t * d_out_p              # f32 accumulator scratch
                    + 3 * 4 * t * c)               # h + GELU temporaries

        while (stream_bytes(tm_s, th_s) > budget and th_s > 128
               and (th_s // 2) % 128 == 0 and h_p % (th_s // 2) == 0):
            th_s //= 2
        while stream_bytes(tm_s, th_s) > budget and tm_s > max(sublane, 128):
            tm_s = max(sublane, ((tm_s // 2) // sublane) * sublane)

        m_pad = _round_up(m_sub, tm_s)
        if m_pad != m:
            x2 = jnp.pad(x2, ((0, m_pad - m), (0, 0)))
        grid = (m_pad // tm_s, h_p // th_s)
        n_row_tiles = grid[0]

        flops = 2 * m_pad * h_p * (d_in_p + d_out_p)
        bytes_accessed = (cb * m_pad * d_in_p
                          + cb * n_row_tiles * (d_in_p * h_p + h_p * d_out_p)
                          + 4 * (h_p + d_out_p) + ob * m_pad * d_out_p)
        cost = pl.CostEstimate(flops=flops, transcendentals=m_pad * h_p,
                               bytes_accessed=bytes_accessed)

        out = pl.pallas_call(
            _mlp_kernel_stream,
            out_shape=jax.ShapeDtypeStruct((m_pad, d_out_p), out_dtype),
            grid_spec=pltpu.PrefetchScalarGridSpec(
                num_scalar_prefetch=0,
                grid=grid,
                in_specs=[
                    pl.BlockSpec((tm_s, d_in_p), lambda i, k: (i, 0)),   # x rows
                    pl.BlockSpec((d_in_p, th_s), lambda i, k: (0, k)),   # w1 chunk
                    pl.BlockSpec((1, th_s), lambda i, k: (0, k)),        # b1 chunk
                    pl.BlockSpec((th_s, d_out_p), lambda i, k: (k, 0)),  # w2 chunk
                    pl.BlockSpec((1, d_out_p), lambda i, k: (0, 0)),     # b2
                ],
                out_specs=pl.BlockSpec((tm_s, d_out_p), lambda i, k: (i, 0)),
                scratch_shapes=[pltpu.VMEM((tm_s, d_out_p), jnp.float32)],
            ),
            compiler_params=pltpu.CompilerParams(
                dimension_semantics=("parallel", "arbitrary"),
                vmem_limit_bytes=int(budget)),
            cost_estimate=cost,
        )(x2, w1p, b1p, w2p, b2p)

    out = out[:m, :d_out]
    return out.reshape(*orig_shape[:-1], d_out)


def _ref_mlp(x, w1, b1, w2, b2):
    h = x @ w1 + b1
    h = 0.5 * h * (1.0 + jax.lax.erf(h * _INV_SQRT2))
    return h @ w2 + b2


if __name__ == "__main__":
    # Lane-aligned feature dims; token count not a multiple of the row tile to
    # exercise the row-padding path.
    B, N = 2, 250
    in_features, hidden_features, out_features = 128, 256, 128

    key = jax.random.PRNGKey(0)
    kx, k1, k2, k3, k4, k5, k6, k7 = jax.random.split(key, 8)

    x = jax.random.normal(kx, (B, N, in_features), dtype=jnp.float32)

    lim1 = 1.0 / math.sqrt(in_features)
    lim2 = 1.0 / math.sqrt(hidden_features)
    w1 = jax.random.uniform(k1, (in_features, hidden_features),
                            minval=-lim1, maxval=lim1, dtype=jnp.float32)
    b1 = jax.random.uniform(k2, (hidden_features,),
                            minval=-lim1, maxval=lim1, dtype=jnp.float32)
    w2 = jax.random.uniform(k3, (hidden_features, out_features),
                            minval=-lim2, maxval=lim2, dtype=jnp.float32)
    b2 = jax.random.uniform(k4, (out_features,),
                            minval=-lim2, maxval=lim2, dtype=jnp.float32)

    y_ref = _ref_mlp(x.reshape(-1, in_features), w1, b1, w2, b2).reshape(
        B, N, out_features)

    # 1) Default fast path: weights resident in VMEM, bf16 matmuls, f32
    #    accumulation + f32 erf-GELU epilogue.
    y_bf16 = jax.block_until_ready(mlp_pallas(x, w1, b1, w2, b2))
    assert y_bf16.shape == (B, N, out_features)
    assert jnp.allclose(y_bf16, y_ref, atol=3e-2, rtol=3e-2), (
        float(jnp.max(jnp.abs(y_bf16 - y_ref))))

    # 2) f32 resident path — tight check against the f32 reference.
    y_f32 = jax.block_until_ready(
        mlp_pallas(x, w1, b1, w2, b2, compute_dtype=jnp.float32))
    assert jnp.allclose(y_f32, y_ref, atol=2e-5, rtol=2e-5), (
        float(jnp.max(jnp.abs(y_f32 - y_ref))))

    # 3) Hidden-streaming fallback (H=512, th=256 -> two hidden chunks) to
    #    validate the f32 accumulator init/finalize path used for big models.
    lim1b = 1.0 / math.sqrt(in_features)
    lim2b = 1.0 / math.sqrt(512)
    w1b = jax.random.uniform(k5, (in_features, 512),
                             minval=-lim1b, maxval=lim1b, dtype=jnp.float32)
    b1b = jax.random.uniform(k6, (512,),
                             minval=-lim1b, maxval=lim1b, dtype=jnp.float32)
    w2b = jax.random.uniform(k7, (512, out_features),
                             minval=-lim2b, maxval=lim2b, dtype=jnp.float32)
    y_ref_b = _ref_mlp(x.reshape(-1, in_features), w1b, b1b, w2b, b2).reshape(
        B, N, out_features)
    y_stream = jax.block_until_ready(
        mlp_pallas(x, w1b, b1b, w2b, b2, compute_dtype=jnp.float32,
                   force_streaming=True, th=256))
    assert jnp.allclose(y_stream, y_ref_b, atol=2e-5, rtol=2e-5), (
        float(jnp.max(jnp.abs(y_stream - y_ref_b))))

    print("KERNEL_OK")
</pallas_src>

<mosaic_0001>
module attributes {stable_mosaic.version = 11 : i64} {
  func.func @_mlp_kernel_resident(%arg0: i32, %arg1: memref<256x128xbf16, #tpu.memory_space<vmem>>, %arg2: memref<128x256xbf16, #tpu.memory_space<vmem>>, %arg3: memref<1x256xf32, #tpu.memory_space<vmem>>, %arg4: memref<256x128xbf16, #tpu.memory_space<vmem>>, %arg5: memref<1x128xf32, #tpu.memory_space<vmem>>, %arg6: memref<256x128xf32, #tpu.memory_space<vmem>>) attributes {dimension_semantics = [#tpu.dimension_semantics<parallel>], iteration_bounds = array<i64: 2>, scalar_prefetch = 0 : i64, scratch_operands = 0 : i64, tpu.core_type = #tpu.core_type<tc>, window_params = [{transform_indices = @transform_0, window_bounds = array<i64: 256, 128>}, {pipeline_mode = #tpu.pipeline_mode<synchronous>, transform_indices = @transform_1, window_bounds = array<i64: 128, 256>}, {pipeline_mode = #tpu.pipeline_mode<synchronous>, transform_indices = @transform_2, window_bounds = array<i64: 1, 256>}, {pipeline_mode = #tpu.pipeline_mode<synchronous>, transform_indices = @transform_3, window_bounds = array<i64: 256, 128>}, {pipeline_mode = #tpu.pipeline_mode<synchronous>, transform_indices = @transform_4, window_bounds = array<i64: 1, 128>}, {transform_indices = @transform_5, window_bounds = array<i64: 256, 128>}]} {
    %c0 = arith.constant 0 : index
    %c0_0 = arith.constant 0 : index
    %0 = vector.load %arg1[%c0, %c0_0] : memref<256x128xbf16, #tpu.memory_space<vmem>>, vector<256x128xbf16>
    %c0_1 = arith.constant 0 : index
    %c0_2 = arith.constant 0 : index
    %1 = vector.load %arg2[%c0_1, %c0_2] : memref<128x256xbf16, #tpu.memory_space<vmem>>, vector<128x256xbf16>
    %cst = arith.constant dense<0.000000e+00> : vector<256x256xf32>
    %2 = tpu.matmul %0, %1, %cst {dimension_numbers = #tpu.dot_dimension_numbers<[1], [0], [0], [1], [0, 0, 1, 1], [], []>} : vector<256x128xbf16>, vector<128x256xbf16>, vector<256x256xf32> -> vector<256x256xf32>
    %c0_3 = arith.constant 0 : index
    %c0_4 = arith.constant 0 : index
    %3 = vector.load %arg3[%c0_3, %c0_4] : memref<1x256xf32, #tpu.memory_space<vmem>>, vector<1x256xf32>
    %4 = vector.broadcast %3 : vector<1x256xf32> to vector<256x256xf32>
    %5 = arith.addf %2, %4 : vector<256x256xf32>
    %cst_5 = arith.constant 5.000000e-01 : f32
    %6 = vector.broadcast %cst_5 : f32 to vector<256x256xf32>
    %7 = arith.mulf %6, %5 : vector<256x256xf32>
    %cst_6 = arith.constant 0.707106769 : f32
    %8 = vector.broadcast %cst_6 : f32 to vector<256x256xf32>
    %9 = arith.mulf %5, %8 : vector<256x256xf32>
    %10 = math.erf %9 : vector<256x256xf32>
    %cst_7 = arith.constant 1.000000e+00 : f32
    %11 = vector.broadcast %cst_7 : f32 to vector<256x256xf32>
    %12 = arith.addf %11, %10 : vector<256x256xf32>
    %13 = arith.mulf %7, %12 : vector<256x256xf32>
    %14 = arith.truncf %13 : vector<256x256xf32> to vector<256x256xbf16>
    %c0_8 = arith.constant 0 : index
    %c0_9 = arith.constant 0 : index
    %15 = vector.load %arg4[%c0_8, %c0_9] : memref<256x128xbf16, #tpu.memory_space<vmem>>, vector<256x128xbf16>
    %cst_10 = arith.constant dense<0.000000e+00> : vector<256x128xf32>
    %16 = tpu.matmul %14, %15, %cst_10 {dimension_numbers = #tpu.dot_dimension_numbers<[1], [0], [0], [1], [0, 0, 1, 1], [], []>} : vector<256x256xbf16>, vector<256x128xbf16>, vector<256x128xf32> -> vector<256x128xf32>
    %c0_11 = arith.constant 0 : index
    %c0_12 = arith.constant 0 : index
    %17 = vector.load %arg5[%c0_11, %c0_12] : memref<1x128xf32, #tpu.memory_space<vmem>>, vector<1x128xf32>
    %18 = vector.broadcast %17 : vector<1x128xf32> to vector<256x128xf32>
    %19 = arith.addf %16, %18 : vector<256x128xf32>
    %c0_13 = arith.constant 0 : index
    %c0_14 = arith.constant 0 : index
    %20 = vector.load %arg6[%c0_13, %c0_14] : memref<256x128xf32, #tpu.memory_space<vmem>>, vector<256x128xf32>
    tpu.vector_store %arg6[%c0_13, %c0_14], %19 {strides = array<i32>} : memref<256x128xf32, #tpu.memory_space<vmem>>, vector<256x128xf32>,
    return
  }
  func.func @transform_0(%arg0: i32) -> (i32, i32) {
    %c0_i32 = arith.constant 0 : i32
    %c0_i32_0 = arith.constant 0 : i32
    return %arg0, %c0_i32 : i32, i32
  }
  func.func @transform_1(%arg0: i32) -> (i32, i32) {
    %c0_i32 = arith.constant 0 : i32
    %c0_i32_0 = arith.constant 0 : i32
    %c0_i32_1 = arith.constant 0 : i32
    return %c0_i32, %c0_i32_0 : i32, i32
  }
  func.func @transform_2(%arg0: i32) -> (i32, i32) {
    %c0_i32 = arith.constant 0 : i32
    %c0_i32_0 = arith.constant 0 : i32
    %c0_i32_1 = arith.constant 0 : i32
    return %c0_i32, %c0_i32_0 : i32, i32
  }
  func.func @transform_3(%arg0: i32) -> (i32, i32) {
    %c0_i32 = arith.constant 0 : i32
    %c0_i32_0 = arith.constant 0 : i32
    %c0_i32_1 = arith.constant 0 : i32
    return %c0_i32, %c0_i32_0 : i32, i32
  }
  func.func @transform_4(%arg0: i32) -> (i32, i32) {
    %c0_i32 = arith.constant 0 : i32
    %c0_i32_0 = arith.constant 0 : i32
    %c0_i32_1 = arith.constant 0 : i32
    return %c0_i32, %c0_i32_0 : i32, i32
  }
  func.func @transform_5(%arg0: i32) -> (i32, i32) {
    %c0_i32 = arith.constant 0 : i32
    %c0_i32_0 = arith.constant 0 : i32
    return %arg0, %c0_i32 : i32, i32
  }
}

</mosaic_0001>

<llo_original>
// kernel: tpu_custom_call.1
$region0: #{tpu_custom_call.1}
  #allocation0 [shape = 'u32[]', space=smem, size = 0x4, offset = 0x4, fixed_abs, tag = 'smem constant byte address 0x4 - core index']
  #allocation1 [shape = 'u32[144,128]{1,0:T(1,128)}', space=vmem, size = 0x12000, scoped, tag = 'internal scratch']
  %s0 = inlined_call_operand.hbm [shape: bf16[512,128], index: 0, kind: input, shape index: {}]
  %s1 = inlined_call_operand.hbm [shape: bf16[128,256], index: 1, kind: input, shape index: {}]
  %s2 = inlined_call_operand.vmem [shape: f32[1,256], index: 2, kind: input, shape index: {}]
  %s3 = inlined_call_operand.hbm [shape: bf16[256,128], index: 3, kind: input, shape index: {}]
  %s4 = inlined_call_operand.vmem [shape: f32[1,128], index: 4, kind: input, shape index: {}]
  %s5 = inlined_call_operand.hbm [shape: f32[512,128], index: 5, kind: output, shape index: {}]
  %s6 = sld [smem:[#allocation0]]
  $region65: #{tpu_custom_call.1} parent=0
    _
  %s8 = ssub.s32 1, %s6
  %s9 = scalar_select 0, %s8, %s6
  $region1: #{tpu_custom_call.1} parent=0
    #allocation2 [shape = 'u8[131072]{0}', space=vmem, size = 0x20000, scoped, tag = 'input window, operand 0']
    #allocation3 [shape = 's32[2]{0}', space=sflag, size = 0x8, scoped, tag = 'scoped memory for tpu_custom_call.1']
    #allocation4 [shape = 's32[2]{0}', space=sflag, size = 0x8, scoped, tag = 'scoped memory for tpu_custom_call.1']
    #allocation5 [shape = 'u8[65536]{0}', space=vmem, size = 0x10000, scoped, tag = 'input window, operand 1, single buffered']
    #allocation6 [shape = 's32[1]{0}', space=sflag, size = 0x4, scoped, tag = 'scoped memory for tpu_custom_call.1']
    #allocation7 [shape = 'u8[65536]{0}', space=vmem, size = 0x10000, scoped, tag = 'input window, operand 3, single buffered']
    #allocation8 [shape = 'u8[262144]{0}', space=vmem, size = 0x40000, scoped, tag = 'output window, operand 0']
    %10 = vsyncpa [#allocation3], 0
    %s11 = scalar_lea.sflag [#allocation3], 1
    %12 = vsyncpa %s11, 0
    %13 = vsyncpa [#allocation6], 0
    %14 = vsyncpa [#allocation4], 0
    %s15 = scalar_lea.sflag [#allocation4], 1
    %16 = vsyncpa %s15, 0
    loop: start=0, step=1, limit=4
    $region2: #{tpu_custom_call.1} parent=1 // loop_pre_header
      _
    $region3: #{tpu_custom_call.1} parent=1 // loop_header
      %s18 = sphi 0, %s22
      %p19 = scmp.ge.s32.totalorder %s18, 4
      %s28 = sphi 0, %s30
      %s31 = sphi 0, %s28
      %s32 = sphi 0, %s31
      %s48 = sphi 0, %s32
      %s52 = sphi 0, %s52
      %s54 = sphi 0, %s52
      %s55 = sphi 0, %s54
      %s69 = sphi 0, %s55
      %s73 = sphi 0, %s73
      %s75 = sphi 0, %s73
      %s76 = sphi 0, %s75
      %s90 = sphi 0, %s76
      %s94 = sphi 0, %s94
      %s96 = sphi 0, %s94
      %s97 = sphi 0, %s96
      %s111 = sphi 0, %s97
      %s115 = sphi 0, %s115
      %s117 = sphi 0, %s115
      %s118 = sphi 0, %s117
      %s132 = sphi 0, %s118
      %s138 = sphi 0, %s140
      %s141 = sphi 0, %s138
      %s142 = sphi 0, %s141
      %s158 = sphi 0, %s142
    $region4: #{tpu_custom_call.1} parent=1 // loop_header_branch
      %21 = sbr.rel (%p19) target = $region8
    $region5: #{tpu_custom_call.1} parent=1 // loop_body
      %s23 = ssub.s32 %s18, 1
      %s24 = ssub.s32 %s18, 2
      %s25 = sadd.s32 %s18, 1
      %s26 = ssub.s32 %s18, %s25
      %p27 = scmp.eq.s32.totalorder %s26, 0
      %s29 = sadd.s32 %s28, 1
      %s30 = scalar_select %p27, %s28, %s29
      %p33 = pneg %p27
      %p34 = scmp.eq.s32.totalorder %s18, 1
      %p35 = por %p33, %p34
      %p36 = scmp.ne.s32.totalorder %s28, %s31
      %p37 = scmp.eq.s32.totalorder %s18, 0
      %p38 = por %p36, %p37
      %p39 = scmp.ne.s32.totalorder %s28, %s31
      %p40 = scmp.eq.s32.totalorder %s23, 1
      %p41 = por %p39, %p40
      %p42 = scmp.ne.s32.totalorder %s31, %s32
      %p43 = scmp.eq.s32.totalorder %s23, 0
      %p44 = por %p42, %p43
      %p45 = scmp.ne.s32.totalorder %s31, %s32
      %p46 = scmp.eq.s32.totalorder %s24, 1
      %p47 = por %p45, %p46
      %p49 = scmp.ne.s32.totalorder %s32, %s48
      %p50 = scmp.eq.s32.totalorder %s24, 0
      %p51 = por %p49, %p50
      %s53 = sadd.s32 %s52, 1
      %p56 = scmp.eq.s32.totalorder %s18, 1
      %p57 = scmp.ne.s32.totalorder %s52, %s54
      %p58 = scmp.eq.s32.totalorder %s18, 0
      %p59 = por %p57, %p58
      %p60 = scmp.ne.s32.totalorder %s52, %s54
      %p61 = scmp.eq.s32.totalorder %s23, 1
      %p62 = por %p60, %p61
      %p63 = scmp.ne.s32.totalorder %s54, %s55
      %p64 = scmp.eq.s32.totalorder %s23, 0
      %p65 = por %p63, %p64
      %p66 = scmp.ne.s32.totalorder %s54, %s55
      %p67 = scmp.eq.s32.totalorder %s24, 1
      %p68 = por %p66, %p67
      %p70 = scmp.ne.s32.totalorder %s55, %s69
      %p71 = scmp.eq.s32.totalorder %s24, 0
      %p72 = por %p70, %p71
      %s74 = sadd.s32 %s73, 1
      %p77 = scmp.eq.s32.totalorder %s18, 1
      %p78 = scmp.ne.s32.totalorder %s73, %s75
      %p79 = scmp.eq.s32.totalorder %s18, 0
      %p80 = por %p78, %p79
      %p81 = scmp.ne.s32.totalorder %s73, %s75
      %p82 = scmp.eq.s32.totalorder %s23, 1
      %p83 = por %p81, %p82
      %p84 = scmp.ne.s32.totalorder %s75, %s76
      %p85 = scmp.eq.s32.totalorder %s23, 0
      %p86 = por %p84, %p85
      %p87 = scmp.ne.s32.totalorder %s75, %s76
      %p88 = scmp.eq.s32.totalorder %s24, 1
      %p89 = por %p87, %p88
      %p91 = scmp.ne.s32.totalorder %s76, %s90
      %p92 = scmp.eq.s32.totalorder %s24, 0
      %p93 = por %p91, %p92
      %s95 = sadd.s32 %s94, 1
      %p98 = scmp.eq.s32.totalorder %s18, 1
      %p99 = scmp.ne.s32.totalorder %s94, %s96
      %p100 = scmp.eq.s32.totalorder %s18, 0
      %p101 = por %p99, %p100
      %p102 = scmp.ne.s32.totalorder %s94, %s96
      %p103 = scmp.eq.s32.totalorder %s23, 1
      %p104 = por %p102, %p103
      %p105 = scmp.ne.s32.totalorder %s96, %s97
      %p106 = scmp.eq.s32.totalorder %s23, 0
      %p107 = por %p105, %p106
      %p108 = scmp.ne.s32.totalorder %s96, %s97
      %p109 = scmp.eq.s32.totalorder %s24, 1
      %p110 = por %p108, %p109
      %p112 = scmp.ne.s32.totalorder %s97, %s111
      %p113 = scmp.eq.s32.totalorder %s24, 0
      %p114 = por %p112, %p113
      %s116 = sadd.s32 %s115, 1
      %p119 = scmp.eq.s32.totalorder %s18, 1
      %p120 = scmp.ne.s32.totalorder %s115, %s117
      %p121 = scmp.eq.s32.totalorder %s18, 0
      %p122 = por %p120, %p121
      %p123 = scmp.ne.s32.totalorder %s115, %s117
      %p124 = scmp.eq.s32.totalorder %s23, 1
      %p125 = por %p123, %p124
      %p126 = scmp.ne.s32.totalorder %s117, %s118
      %p127 = scmp.eq.s32.totalorder %s23, 0
      %p128 = por %p126, %p127
      %p129 = scmp.ne.s32.totalorder %s117, %s118
      %p130 = scmp.eq.s32.totalorder %s24, 1
      %p131 = por %p129, %p130
      %p133 = scmp.ne.s32.totalorder %s118, %s132
      %p134 = scmp.eq.s32.totalorder %s24, 0
      %p135 = por %p133, %p134
      %s136 = ssub.s32 %s18, %s25
      %p137 = scmp.eq.s32.totalorder %s136, 0
      %s139 = sadd.s32 %s138, 1
      %s140 = scalar_select %p137, %s138, %s139
      %p143 = pneg %p137
      %p144 = scmp.eq.s32.totalorder %s18, 1
      %p145 = por %p143, %p144
      %p146 = scmp.ne.s32.totalorder %s138, %s141
      %p147 = scmp.eq.s32.totalorder %s18, 0
      %p148 = por %p146, %p147
      %p149 = scmp.ne.s32.totalorder %s138, %s141
      %p150 = scmp.eq.s32.totalorder %s23, 1
      %p151 = por %p149, %p150
      %p152 = scmp.ne.s32.totalorder %s141, %s142
      %p153 = scmp.eq.s32.totalorder %s23, 0
      %p154 = por %p152, %p153
      %p155 = scmp.ne.s32.totalorder %s141, %s142
      %p156 = scmp.eq.s32.totalorder %s24, 1
      %p157 = por %p155, %p156
      %p159 = scmp.ne.s32.totalorder %s142, %s158
      %p160 = scmp.eq.s32.totalorder %s24, 0
      %p161 = por %p159, %p160
      %p162 = scmp.le.s32.totalorder 1, %s18
      %p163 = scmp.lt.s32.totalorder %s18, 3
      %p164 = pnand %p162, %p163
      %p165 = pneg %p164
      // Predicated region
      $region9: #{tpu_custom_call.1} parent=5 // pred_check
        _
      $region10: #{tpu_custom_call.1} parent=5 // pred_check_branch
        %167 = sbr.rel (%p164) target = $region12
      $region11: #{tpu_custom_call.1} parent=5 // pred_region
        %s168 = ssub.s32 %s18, 1
        // Predicated region
        $region13: #{tpu_custom_call.1} parent=11 // pred_check
          %p169 = pneg %p65
        $region14: #{tpu_custom_call.1} parent=11 // pred_check_branch
          %171 = sbr.rel (%p169) target = $region16
        $region15: #{tpu_custom_call.1} parent=11 // pred_region
          %s173 = ssub.s32 2048, 2048
          %174 = vsyncadd [#allocation6], %s173
          %s175 = sshll.u32 [#allocation5], 4
          %s176 = int_to_ptr.vmem [resolvable:$true] %s175
          %181 = dma.hbm_to_vmem [thread:$0]  %s1, 2048, %s176, [#allocation6], 128, 128, 8
        $region16: #{tpu_custom_call.1} parent=11 // pred_fallthru
          _
        // Predicated region
        $region17: #{tpu_custom_call.1} parent=11 // pred_check
          %p182 = pneg %p86
        $region18: #{tpu_custom_call.1} parent=11 // pred_check_branch
          %184 = sbr.rel (%p182) target = $region20
        $region19: #{tpu_custom_call.1} parent=11 // pred_region
          _
        $region20: #{tpu_custom_call.1} parent=11 // pred_fallthru
          _
        // Predicated region
        $region21: #{tpu_custom_call.1} parent=11 // pred_check
          %p185 = pneg %p107
        $region22: #{tpu_custom_call.1} parent=11 // pred_check_branch
          %187 = sbr.rel (%p185) target = $region24
        $region23: #{tpu_custom_call.1} parent=11 // pred_region
          %s189 = ssub.s32 2048, 2048
          %190 = vsyncadd [#allocation6], %s189
          %s191 = sshll.u32 [#allocation7], 4
          %s192 = int_to_ptr.vmem [resolvable:$true] %s191
          %197 = dma.hbm_to_vmem [thread:$0]  %s3, 2048, %s192, [#allocation6], 64, 64, 4
        $region24: #{tpu_custom_call.1} parent=11 // pred_fallthru
          _
        // Predicated region
        $region25: #{tpu_custom_call.1} parent=11 // pred_check
          %p198 = pneg %p128
        $region26: #{tpu_custom_call.1} parent=11 // pred_check_branch
          %200 = sbr.rel (%p198) target = $region28
        $region27: #{tpu_custom_call.1} parent=11 // pred_region
          _
        $region28: #{tpu_custom_call.1} parent=11 // pred_fallthru
          _
      $region12: #{tpu_custom_call.1} parent=5 // pred_fallthru
        _
      %p201 = scmp.lt.s32.totalorder %s18, 2
      // Predicated region
      $region29: #{tpu_custom_call.1} parent=5 // pred_check
        %p202 = pneg %p201
      $region30: #{tpu_custom_call.1} parent=5 // pred_check_branch
        %204 = sbr.rel (%p202) target = $region32
      $region31: #{tpu_custom_call.1} parent=5 // pred_region
        // Predicated region
        $region33: #{tpu_custom_call.1} parent=31 // pred_check
          %p205 = pneg %p38
        $region34: #{tpu_custom_call.1} parent=31 // pred_check_branch
          %207 = sbr.rel (%p205) target = $region36
        $region35: #{tpu_custom_call.1} parent=31 // pred_region
          %s208 = sand.u32 %s28, 1
          %s209 = scalar_lea.sflag [#allocation3], %s208
          %s210 = sand.u32 %s28, 1
          %s211 = smul.addr %s210, 128
          %s212 = scalar_lea.vmem [#allocation2], %s211
          %s213 = smul.u32 32, %s18
          %s215 = ssub.s32 2048, 2048
          %216 = vsyncadd %s209, %s215
          %s217 = smul.addr %s213, 64
          %s218 = scalar_lea.hbm %s0, %s217
          %s219 = sshll.u32 %s212, 4
          %s220 = int_to_ptr.vmem [resolvable:$true] %s219
          %225 = dma.hbm_to_vmem [thread:$0]  %s218, 2048, %s220, %s209, 64, 64, 4
        $region36: #{tpu_custom_call.1} parent=31 // pred_fallthru
          _
      $region32: #{tpu_custom_call.1} parent=5 // pred_fallthru
        _
      %p226 = scmp.le.s32.totalorder 1, %s18
      %p227 = scmp.lt.s32.totalorder %s18, 3
      %p228 = pnand %p226, %p227
      %p229 = pneg %p228
      // Predicated region
      $region37: #{tpu_custom_call.1} parent=5 // pred_check
        _
      $region38: #{tpu_custom_call.1} parent=5 // pred_check_branch
        %231 = sbr.rel (%p228) target = $region40
      $region39: #{tpu_custom_call.1} parent=5 // pred_region
        %s232 = ssub.s32 %s18, 1
        %s233 = sand.u32 %s31, 1
        %s234 = scalar_lea.sflag [#allocation3], %s233
        %s235 = sand.u32 %s31, 1
        %s236 = smul.addr %s235, 128
        %s237 = scalar_lea.vmem [#allocation2], %s236
        // Predicated region
        $region41: #{tpu_custom_call.1} parent=39 // pred_check
          %p238 = pneg %p44
        $region42: #{tpu_custom_call.1} parent=39 // pred_check_branch
          %240 = sbr.rel (%p238) target = $region44
        $region43: #{tpu_custom_call.1} parent=39 // pred_region
          %241 = dma.done %s234, 2048
        $region44: #{tpu_custom_call.1} parent=39 // pred_fallthru
          _
        // Predicated region
        $region45: #{tpu_custom_call.1} parent=39 // pred_check
          %p242 = pneg %p65
        $region46: #{tpu_custom_call.1} parent=39 // pred_check_branch
          %244 = sbr.rel (%p242) target = $region48
        $region47: #{tpu_custom_call.1} parent=39 // pred_region
          %245 = dma.done [#allocation6], 2048
        $region48: #{tpu_custom_call.1} parent=39 // pred_fallthru
          _
        // Predicated region
        $region49: #{tpu_custom_call.1} parent=39 // pred_check
          %p246 = pneg %p107
        $region50: #{tpu_custom_call.1} parent=39 // pred_check_branch
          %248 = sbr.rel (%p246) target = $region52
        $region51: #{tpu_custom_call.1} parent=39 // pred_region
          %249 = dma.done [#allocation6], 2048
        $region52: #{tpu_custom_call.1} parent=39 // pred_fallthru
          _
        %s250 = sand.u32 %s31, 1
        %s251 = scalar_lea.sflag [#allocation3], %s250
        %s252 = sand.u32 %s31, 1
        %s253 = smul.addr %s252, 128
        %s254 = scalar_lea.vmem [#allocation2], %s253
        %p255 = pneg %p44
        %p256 = pneg %p41
        %p257 = pneg %p65
        %p258 = pneg %p62
        %p259 = pneg %p86
        %p260 = pneg %p83
        %p261 = pneg %p107
        %p262 = pneg %p104
        %p263 = pneg %p128
        %p264 = pneg %p125
        %p265 = pneg %p154
        %p266 = pneg %p151
        %s267 = sand.u32 %s141, 1
        %s268 = scalar_lea.sflag [#allocation4], %s267
        %s269 = sand.u32 %s141, 1
        %s270 = smul.addr %s269, 256
        %s271 = scalar_lea.vmem [#allocation8], %s270
        %s272 = smul.u32 32, %s23
        %s273 = smul.u32 32, %s23
        %v275 = vld [vmem:[%s237] sm:$0xf]
        %v276 = vld [vmem:[%s237 + $0x4] sm:$0xf]
        %v277 = vld [vmem:[%s237 + $0x8] sm:$0xf]
        %v278 = vld [vmem:[%s237 + $0xc] sm:$0xf]
        %v279 = vld [vmem:[%s237 + $0x10] sm:$0xf]
        %v280 = vld [vmem:[%s237 + $0x14] sm:$0xf]
        %v281 = vld [vmem:[%s237 + $0x18] sm:$0xf]
        %v282 = vld [vmem:[%s237 + $0x1c] sm:$0xf]
        %v283 = vld [vmem:[%s237 + $0x20] sm:$0xf]
        %v284 = vld [vmem:[%s237 + $0x24] sm:$0xf]
        %v285 = vld [vmem:[%s237 + $0x28] sm:$0xf]
        %v286 = vld [vmem:[%s237 + $0x2c] sm:$0xf]
        %v287 = vld [vmem:[%s237 + $0x30] sm:$0xf]
        %v288 = vld [vmem:[%s237 + $0x34] sm:$0xf]
        %v289 = vld [vmem:[%s237 + $0x38] sm:$0xf]
        %v290 = vld [vmem:[%s237 + $0x3c] sm:$0xf]
        %v291 = vld [vmem:[%s237 + $0x40] sm:$0xf]
        %v292 = vld [vmem:[%s237 + $0x44] sm:$0xf]
        %v293 = vld [vmem:[%s237 + $0x48] sm:$0xf]
        %v294 = vld [vmem:[%s237 + $0x4c] sm:$0xf]
        %v295 = vld [vmem:[%s237 + $0x50] sm:$0xf]
        %v296 = vld [vmem:[%s237 + $0x54] sm:$0xf]
        %v297 = vld [vmem:[%s237 + $0x58] sm:$0xf]
        %v298 = vld [vmem:[%s237 + $0x5c] sm:$0xf]
        %v299 = vld [vmem:[%s237 + $0x60] sm:$0xf]
        %v300 = vld [vmem:[%s237 + $0x64] sm:$0xf]
        %v301 = vld [vmem:[%s237 + $0x68] sm:$0xf]
        %v302 = vld [vmem:[%s237 + $0x6c] sm:$0xf]
        %v303 = vld [vmem:[%s237 + $0x70] sm:$0xf]
        %v304 = vld [vmem:[%s237 + $0x74] sm:$0xf]
        %v305 = vld [vmem:[%s237 + $0x78] sm:$0xf]
        %v306 = vld [vmem:[%s237 + $0x7c] sm:$0xf]
        %v307 = vld [vmem:[#allocation5] sm:$0xff]
        %v308 = vld [vmem:[#allocation5 + $0x8] sm:$0xff]
        %v309 = vld [vmem:[#allocation5 + $0x10] sm:$0xff]
        %v310 = vld [vmem:[#allocation5 + $0x18] sm:$0xff]
        %v311 = vld [vmem:[#allocation5 + $0x20] sm:$0xff]
        %v312 = vld [vmem:[#allocation5 + $0x28] sm:$0xff]
        %v313 = vld [vmem:[#allocation5 + $0x30] sm:$0xff]
        %v314 = vld [vmem:[#allocation5 + $0x38] sm:$0xff]
        %v315 = vld [vmem:[#allocation5 + $0x40] sm:$0xff]
        %v316 = vld [vmem:[#allocation5 + $0x48] sm:$0xff]
        %v317 = vld [vmem:[#allocation5 + $0x50] sm:$0xff]
        %v318 = vld [vmem:[#allocation5 + $0x58] sm:$0xff]
        %v319 = vld [vmem:[#allocation5 + $0x60] sm:$0xff]
        %v320 = vld [vmem:[#allocation5 + $0x68] sm:$0xff]
        %v321 = vld [vmem:[#allocation5 + $0x70] sm:$0xff]
        %v322 = vld [vmem:[#allocation5 + $0x78] sm:$0xff]
        %v323 = vld [vmem:[%s2] sm:$0x3]
        %v325 = vlaneseq
        %v326 = vshrl.u32 %v325, 7
        %v327 = vsub.s32 0, %v326
        %v328 = vrot.slane %v323, %v327
        %v329 = vlaneseq
        %v330 = vshrl.u32 %v329, 7
        %v331 = vsub.s32 1, %v330
        %v332 = vrot.slane %v323, %v331
        %v367 = vunpack.c.l.b16 %v275
        %v368 = vunpack.c.l.b16 %v276
        %v369 = vunpack.c.l.b16 %v277
        %v370 = vunpack.c.l.b16 %v278
        %v371 = vunpack.c.l.b16 %v279
        %v372 = vunpack.c.l.b16 %v280
        %v373 = vunpack.c.l.b16 %v281
        %v374 = vunpack.c.l.b16 %v282
        %v375 = vunpack.c.l.b16 %v283
        %v376 = vunpack.c.l.b16 %v284
        %v377 = vunpack.c.l.b16 %v285
        %v378 = vunpack.c.l.b16 %v286
        %v379 = vunpack.c.l.b16 %v287
        %v380 = vunpack.c.l.b16 %v288
        %v381 = vunpack.c.l.b16 %v289
        %v382 = vunpack.c.l.b16 %v290
        %v383 = vunpack.c.l.b16 %v291
        %v384 = vunpack.c.l.b16 %v292
        %v385 = vunpack.c.l.b16 %v293
        %v386 = vunpack.c.l.b16 %v294
        %v387 = vunpack.c.l.b16 %v295
        %v388 = vunpack.c.l.b16 %v296
        %v389 = vunpack.c.l.b16 %v297
        %v390 = vunpack.c.l.b16 %v298
        %v391 = vunpack.c.l.b16 %v299
        %v392 = vunpack.c.l.b16 %v300
        %v393 = vunpack.c.l.b16 %v301
        %v394 = vunpack.c.l.b16 %v302
        %v395 = vunpack.c.l.b16 %v303
        %v396 = vunpack.c.l.b16 %v304
        %v397 = vunpack.c.l.b16 %v305
        %v398 = vunpack.c.l.b16 %v306
        %v399 = vpack.c.b16 %v368, %v367
        %v400 = vpack.c.b16 %v370, %v369
        %v401 = vpack.c.b16 %v372, %v371
        %v402 = vpack.c.b16 %v374, %v373
        %v403 = vpack.c.b16 %v376, %v375
        %v404 = vpack.c.b16 %v378, %v377
        %v405 = vpack.c.b16 %v380, %v379
        %v406 = vpack.c.b16 %v382, %v381
        %v407 = vpack.c.b16 %v384, %v383
        %v408 = vpack.c.b16 %v386, %v385
        %v409 = vpack.c.b16 %v388, %v387
        %v410 = vpack.c.b16 %v390, %v389
        %v411 = vpack.c.b16 %v392, %v391
        %v412 = vpack.c.b16 %v394, %v393
        %v413 = vpack.c.b16 %v396, %v395
        %v414 = vpack.c.b16 %v398, %v397
        %v447 = vunpack.c.l.b16 %v307
        %v448 = vunpack.c.h.b16 %v307
        %v449 = vunpack.c.l.b16 %v308
        %v450 = vunpack.c.h.b16 %v308
        %v451 = vunpack.c.l.b16 %v309
        %v452 = vunpack.c.h.b16 %v309
        %v453 = vunpack.c.l.b16 %v310
        %v454 = vunpack.c.h.b16 %v310
        %v455 = vunpack.c.l.b16 %v311
        %v456 = vunpack.c.h.b16 %v311
        %v457 = vunpack.c.l.b16 %v312
        %v458 = vunpack.c.h.b16 %v312
        %v459 = vunpack.c.l.b16 %v313
        %v460 = vunpack.c.h.b16 %v313
        %v461 = vunpack.c.l.b16 %v314
        %v462 = vunpack.c.h.b16 %v314
        %v463 = vunpack.c.l.b16 %v315
        %v464 = vunpack.c.h.b16 %v315
        %v465 = vunpack.c.l.b16 %v316
        %v466 = vunpack.c.h.b16 %v316
        %v467 = vunpack.c.l.b16 %v317
        %v468 = vunpack.c.h.b16 %v317
        %v469 = vunpack.c.l.b16 %v318
        %v470 = vunpack.c.h.b16 %v318
        %v471 = vunpack.c.l.b16 %v319
        %v472 = vunpack.c.h.b16 %v319
        %v473 = vunpack.c.l.b16 %v320
        %v474 = vunpack.c.h.b16 %v320
        %v475 = vunpack.c.l.b16 %v321
        %v476 = vunpack.c.h.b16 %v321
        %v477 = vunpack.c.l.b16 %v322
        %v478 = vunpack.c.h.b16 %v322
        %v479 = vpack.c.b16 %v449, %v447
        %v480 = vpack.c.b16 %v450, %v448
        %v481 = vpack.c.b16 %v453, %v451
        %v482 = vpack.c.b16 %v454, %v452
        %v483 = vpack.c.b16 %v457, %v455
        %v484 = vpack.c.b16 %v458, %v456
        %v485 = vpack.c.b16 %v461, %v459
        %v486 = vpack.c.b16 %v462, %v460
        %v487 = vpack.c.b16 %v465, %v463
        %v488 = vpack.c.b16 %v466, %v464
        %v489 = vpack.c.b16 %v469, %v467
        %v490 = vpack.c.b16 %v470, %v468
        %v491 = vpack.c.b16 %v473, %v471
        %v492 = vpack.c.b16 %v474, %v472
        %v493 = vpack.c.b16 %v477, %v475
        %v494 = vpack.c.b16 %v478, %v476
        %511 = vmatprep.subr.bf16.mxu0 %v480
        %512 = vmatpush1.bf16.msra.mxu0 %v479
        %513 = vmatprep.subr.bf16.mxu0 %v482
        %514 = vmatpush1.bf16.msra.mxu0 %v481
        %515 = vmatprep.subr.bf16.mxu0 %v484
        %516 = vmatpush1.bf16.msra.mxu0 %v483
        %517 = vmatprep.subr.bf16.mxu0 %v486
        %518 = vmatpush1.bf16.msra.mxu0 %v485
        %519 = vmatprep.subr.bf16.mxu0 %v488
        %520 = vmatpush1.bf16.msra.mxu0 %v487
        %521 = vmatprep.subr.bf16.mxu0 %v490
        %522 = vmatpush1.bf16.msra.mxu0 %v489
        %523 = vmatprep.subr.bf16.mxu0 %v492
        %524 = vmatpush1.bf16.msra.mxu0 %v491
        %525 = vmatprep.subr.bf16.mxu0 %v494
        %526 = vmatpush1.bf16.msra.mxu0 %v493
        %527 = vmatprep.subr.bf16.mxu0 0
        %528 = vmatpush1.bf16.msra.mxu0 0
        %529 = vmatprep.subr.bf16.mxu0 0
        %530 = vmatpush1.bf16.msra.mxu0 0
        %531 = vmatprep.subr.bf16.mxu0 0
        %532 = vmatpush1.bf16.msra.mxu0 0
        %533 = vmatprep.subr.bf16.mxu0 0
        %534 = vmatpush1.bf16.msra.mxu0 0
        %535 = vmatprep.subr.bf16.mxu0 0
        %536 = vmatpush1.bf16.msra.mxu0 0
        %537 = vmatprep.subr.bf16.mxu0 0
        %538 = vmatpush1.bf16.msra.mxu0 0
        %539 = vmatprep.subr.bf16.mxu0 0
        %540 = vmatpush1.bf16.msra.mxu0 0
        %541 = vmatprep.subr.bf16.mxu0 0
        %542 = vmatpush1.bf16.msra.mxu0 0
        %543 = vmatprep.mubr.bf16.mxu0 0
        %544 = vmatmul.mubr.bf16.gmra.mrb[0].mxu0 %v399
        %v545 = vpop.f32.mrb[0].mxu0
        %v546 = vadd.f32 %v328, %v545
        %v547 = vpop.f32.mrb[0].mxu0
        %v548 = vadd.f32 %v332, %v547
        %v549 = vpop.f32.mrb[0].mxu0
        %v550 = vadd.f32 %v328, %v549
        %v551 = vpop.f32.mrb[0].mxu0
        %v552 = vadd.f32 %v332, %v551
        %553 = vmatprep.mubr.bf16.mxu0 0
        %554 = vmatmul.mubr.bf16.gmra.mrb[0].mxu0 %v400
        %v555 = vpop.f32.mrb[0].mxu0
        %v556 = vadd.f32 %v328, %v555
        %v557 = vpop.f32.mrb[0].mxu0
        %v558 = vadd.f32 %v332, %v557
        %v559 = vpop.f32.mrb[0].mxu0
        %v560 = vadd.f32 %v328, %v559
        %v561 = vpop.f32.mrb[0].mxu0
        %v562 = vadd.f32 %v332, %v561
        %563 = vmatprep.mubr.bf16.mxu0 0
        %564 = vmatmul.mubr.bf16.gmra.mrb[0].mxu0 %v401
        %v565 = vpop.f32.mrb[0].mxu0
        %v566 = vadd.f32 %v328, %v565
        %v567 = vpop.f32.mrb[0].mxu0
        %v568 = vadd.f32 %v332, %v567
        %v569 = vpop.f32.mrb[0].mxu0
        %v570 = vadd.f32 %v328, %v569
        %v571 = vpop.f32.mrb[0].mxu0
        %v572 = vadd.f32 %v332, %v571
        %573 = vmatprep.mubr.bf16.mxu0 0
        %574 = vmatmul.mubr.bf16.gmra.mrb[0].mxu0 %v402
        %v575 = vpop.f32.mrb[0].mxu0
        %v576 = vadd.f32 %v328, %v575
        %v577 = vpop.f32.mrb[0].mxu0
        %v578 = vadd.f32 %v332, %v577
        %v579 = vpop.f32.mrb[0].mxu0
        %v580 = vadd.f32 %v328, %v579
        %v581 = vpop.f32.mrb[0].mxu0
        %v582 = vadd.f32 %v332, %v581
        %583 = vmatprep.mubr.bf16.mxu0 0
        %584 = vmatmul.mubr.bf16.gmra.mrb[0].mxu0 %v403
        %v585 = vpop.f32.mrb[0].mxu0
        %v586 = vadd.f32 %v328, %v585
        %v587 = vpop.f32.mrb[0].mxu0
        %v588 = vadd.f32 %v332, %v587
        %v589 = vpop.f32.mrb[0].mxu0
        %v590 = vadd.f32 %v328, %v589
        %v591 = vpop.f32.mrb[0].mxu0
        %v592 = vadd.f32 %v332, %v591
        %593 = vmatprep.mubr.bf16.mxu0 0
        %594 = vmatmul.mubr.bf16.gmra.mrb[0].mxu0 %v404
        %v595 = vpop.f32.mrb[0].mxu0
        %v596 = vadd.f32 %v328, %v595
        %v597 = vpop.f32.mrb[0].mxu0
        %v598 = vadd.f32 %v332, %v597
        %v599 = vpop.f32.mrb[0].mxu0
        %v600 = vadd.f32 %v328, %v599
        %v601 = vpop.f32.mrb[0].mxu0
        %v602 = vadd.f32 %v332, %v601
        %603 = vmatprep.mubr.bf16.mxu0 0
        %604 = vmatmul.mubr.bf16.gmra.mrb[0].mxu0 %v405
        %v605 = vpop.f32.mrb[0].mxu0
        %v606 = vadd.f32 %v328, %v605
        %v607 = vpop.f32.mrb[0].mxu0
        %v608 = vadd.f32 %v332, %v607
        %v609 = vpop.f32.mrb[0].mxu0
        %v610 = vadd.f32 %v328, %v609
        %v611 = vpop.f32.mrb[0].mxu0
        %v612 = vadd.f32 %v332, %v611
        %613 = vmatprep.mubr.bf16.mxu0 0
        %614 = vmatmul.mubr.bf16.gmra.mrb[0].mxu0 %v406
        %v615 = vpop.f32.mrb[0].mxu0
        %v616 = vadd.f32 %v328, %v615
        %v617 = vpop.f32.mrb[0].mxu0
        %v618 = vadd.f32 %v332, %v617
        %v619 = vpop.f32.mrb[0].mxu0
        %v620 = vadd.f32 %v328, %v619
        %v621 = vpop.f32.mrb[0].mxu0
        %v622 = vadd.f32 %v332, %v621
        %623 = vmatprep.mubr.bf16.mxu0 0
        %624 = vmatmul.mubr.bf16.gmra.mrb[0].mxu0 %v407
        %v625 = vpop.f32.mrb[0].mxu0
        %v626 = vadd.f32 %v328, %v625
        %v627 = vpop.f32.mrb[0].mxu0
        %v628 = vadd.f32 %v332, %v627
        %v629 = vpop.f32.mrb[0].mxu0
        %v630 = vadd.f32 %v328, %v629
        %v631 = vpop.f32.mrb[0].mxu0
        %v632 = vadd.f32 %v332, %v631
        %633 = vmatprep.mubr.bf16.mxu0 0
        %634 = vmatmul.mubr.bf16.gmra.mrb[0].mxu0 %v408
        %v635 = vpop.f32.mrb[0].mxu0
        %v636 = vadd.f32 %v328, %v635
        %v637 = vpop.f32.mrb[0].mxu0
        %v638 = vadd.f32 %v332, %v637
        %v639 = vpop.f32.mrb[0].mxu0
        %v640 = vadd.f32 %v328, %v639
        %v641 = vpop.f32.mrb[0].mxu0
        %v642 = vadd.f32 %v332, %v641
        %643 = vmatprep.mubr.bf16.mxu0 0
        %644 = vmatmul.mubr.bf16.gmra.mrb[0].mxu0 %v409
        %v645 = vpop.f32.mrb[0].mxu0
        %v646 = vadd.f32 %v328, %v645
        %v647 = vpop.f32.mrb[0].mxu0
        %v648 = vadd.f32 %v332, %v647
        %v649 = vpop.f32.mrb[0].mxu0
        %v650 = vadd.f32 %v328, %v649
        %v651 = vpop.f32.mrb[0].mxu0
        %v652 = vadd.f32 %v332, %v651
        %653 = vmatprep.mubr.bf16.mxu0 0
        %654 = vmatmul.mubr.bf16.gmra.mrb[0].mxu0 %v410
        %v655 = vpop.f32.mrb[0].mxu0
        %v656 = vadd.f32 %v328, %v655
        %v657 = vpop.f32.mrb[0].mxu0
        %v658 = vadd.f32 %v332, %v657
        %v659 = vpop.f32.mrb[0].mxu0
        %v660 = vadd.f32 %v328, %v659
        %v661 = vpop.f32.mrb[0].mxu0
        %v662 = vadd.f32 %v332, %v661
        %663 = vmatprep.mubr.bf16.mxu0 0
        %664 = vmatmul.mubr.bf16.gmra.mrb[0].mxu0 %v411
        %v665 = vpop.f32.mrb[0].mxu0
        %v666 = vadd.f32 %v328, %v665
        %v667 = vpop.f32.mrb[0].mxu0
        %v668 = vadd.f32 %v332, %v667
        %v669 = vpop.f32.mrb[0].mxu0
        %v670 = vadd.f32 %v328, %v669
        %v671 = vpop.f32.mrb[0].mxu0
        %v672 = vadd.f32 %v332, %v671
        %673 = vmatprep.mubr.bf16.mxu0 0
        %674 = vmatmul.mubr.bf16.gmra.mrb[0].mxu0 %v412
        %v675 = vpop.f32.mrb[0].mxu0
        %v676 = vadd.f32 %v328, %v675
        %v677 = vpop.f32.mrb[0].mxu0
        %v678 = vadd.f32 %v332, %v677
        %v679 = vpop.f32.mrb[0].mxu0
        %v680 = vadd.f32 %v328, %v679
        %v681 = vpop.f32.mrb[0].mxu0
        %v682 = vadd.f32 %v332, %v681
        %683 = vmatprep.mubr.bf16.mxu0 0
        %684 = vmatmul.mubr.bf16.gmra.mrb[0].mxu0 %v413
        %v685 = vpop.f32.mrb[0].mxu0
        %v686 = vadd.f32 %v328, %v685
        %v687 = vpop.f32.mrb[0].mxu0
        %v688 = vadd.f32 %v332, %v687
        %v689 = vpop.f32.mrb[0].mxu0
        %v690 = vadd.f32 %v328, %v689
        %v691 = vpop.f32.mrb[0].mxu0
        %v692 = vadd.f32 %v332, %v691
        %693 = vmatprep.mubr.bf16.mxu0 0
        %694 = vmatmul.mubr.bf16.gmra.mrb[0].mxu0 %v414
        %v695 = vpop.f32.mrb[0].mxu0
        %v696 = vadd.f32 %v328, %v695
        %v697 = vpop.f32.mrb[0].mxu0
        %v698 = vadd.f32 %v332, %v697
        %v699 = vpop.f32.mrb[0].mxu0
        %v700 = vadd.f32 %v328, %v699
        %v701 = vpop.f32.mrb[0].mxu0
        %v702 = vadd.f32 %v332, %v701
        %703 = vdwg.mxu0
        %v704 = vmul.f32 %v546, 0.5
        %v705 = vmul.f32 %v548, 0.5
        %v706 = vmul.f32 %v550, 0.5
        %v707 = vmul.f32 %v552, 0.5
        %v708 = vmul.f32 %v556, 0.5
        %v709 = vmul.f32 %v558, 0.5
        %v710 = vmul.f32 %v560, 0.5
        %v711 = vmul.f32 %v562, 0.5
        %v712 = vmul.f32 %v566, 0.5
        %v713 = vmul.f32 %v568, 0.5
        %v714 = vmul.f32 %v570, 0.5
        %v715 = vmul.f32 %v572, 0.5
        %v716 = vmul.f32 %v576, 0.5
        %v717 = vmul.f32 %v578, 0.5
        %v718 = vmul.f32 %v580, 0.5
        %v719 = vmul.f32 %v582, 0.5
        %v720 = vmul.f32 %v586, 0.5
        %v721 = vmul.f32 %v588, 0.5
        %v722 = vmul.f32 %v590, 0.5
        %v723 = vmul.f32 %v592, 0.5
        %v724 = vmul.f32 %v596, 0.5
        %v725 = vmul.f32 %v598, 0.5
        %v726 = vmul.f32 %v600, 0.5
        %v727 = vmul.f32 %v602, 0.5
        %v728 = vmul.f32 %v606, 0.5
        %v729 = vmul.f32 %v608, 0.5
        %v730 = vmul.f32 %v610, 0.5
        %v731 = vmul.f32 %v612, 0.5
        %v732 = vmul.f32 %v616, 0.5
        %v733 = vmul.f32 %v618, 0.5
        %v734 = vmul.f32 %v620, 0.5
        %v735 = vmul.f32 %v622, 0.5
        %v736 = vmul.f32 %v626, 0.5
        %v737 = vmul.f32 %v628, 0.5
        %v738 = vmul.f32 %v630, 0.5
        %v739 = vmul.f32 %v632, 0.5
        %v740 = vmul.f32 %v636, 0.5
        %v741 = vmul.f32 %v638, 0.5
        %v742 = vmul.f32 %v640, 0.5
        %v743 = vmul.f32 %v642, 0.5
        %v744 = vmul.f32 %v646, 0.5
        %v745 = vmul.f32 %v648, 0.5
        %v746 = vmul.f32 %v650, 0.5
        %v747 = vmul.f32 %v652, 0.5
        %v748 = vmul.f32 %v656, 0.5
        %v749 = vmul.f32 %v658, 0.5
        %v750 = vmul.f32 %v660, 0.5
        %v751 = vmul.f32 %v662, 0.5
        %v752 = vmul.f32 %v666, 0.5
        %v753 = vmul.f32 %v668, 0.5
        %v754 = vmul.f32 %v670, 0.5
        %v755 = vmul.f32 %v672, 0.5
        %v756 = vmul.f32 %v676, 0.5
        %v757 = vmul.f32 %v678, 0.5
        %v758 = vmul.f32 %v680, 0.5
        %v759 = vmul.f32 %v682, 0.5
        %v760 = vmul.f32 %v686, 0.5
        %v761 = vmul.f32 %v688, 0.5
        %v762 = vmul.f32 %v690, 0.5
        %v763 = vmul.f32 %v692, 0.5
        %v764 = vmul.f32 %v696, 0.5
        %v765 = vmul.f32 %v698, 0.5
        %v766 = vmul.f32 %v700, 0.5
        %v767 = vmul.f32 %v702, 0.5
        %v768 = vmul.f32 %v546, 0.70710677
        %v769 = vmul.f32 %v548, 0.70710677
        %v770 = vmul.f32 %v550, 0.70710677
        %v771 = vmul.f32 %v552, 0.70710677
        %v772 = vmul.f32 %v556, 0.70710677
        %v773 = vmul.f32 %v558, 0.70710677
        %v774 = vmul.f32 %v560, 0.70710677
        %v775 = vmul.f32 %v562, 0.70710677
        %v776 = vmul.f32 %v566, 0.70710677
        %v777 = vmul.f32 %v568, 0.70710677
        %v778 = vmul.f32 %v570, 0.70710677
        %v779 = vmul.f32 %v572, 0.70710677
        %v780 = vmul.f32 %v576, 0.70710677
        %v781 = vmul.f32 %v578, 0.70710677
        %v782 = vmul.f32 %v580, 0.70710677
        %v783 = vmul.f32 %v582, 0.70710677
        %v784 = vmul.f32 %v586, 0.70710677
        %v785 = vmul.f32 %v588, 0.70710677
        %v786 = vmul.f32 %v590, 0.70710677
        %v787 = vmul.f32 %v592, 0.70710677
        %v788 = vmul.f32 %v596, 0.70710677
        %v789 = vmul.f32 %v598, 0.70710677
        %v790 = vmul.f32 %v600, 0.70710677
        %v791 = vmul.f32 %v602, 0.70710677
        %v792 = vmul.f32 %v606, 0.70710677
        %v793 = vmul.f32 %v608, 0.70710677
        %v794 = vmul.f32 %v610, 0.70710677
        %v795 = vmul.f32 %v612, 0.70710677
        %v796 = vmul.f32 %v616, 0.70710677
        %v797 = vmul.f32 %v618, 0.70710677
        %v798 = vmul.f32 %v620, 0.70710677
        %v799 = vmul.f32 %v622, 0.70710677
        %v800 = vmul.f32 %v626, 0.70710677
        %v801 = vmul.f32 %v628, 0.70710677
        %v802 = vmul.f32 %v630, 0.70710677
        %v803 = vmul.f32 %v632, 0.70710677
        %v804 = vmul.f32 %v636, 0.70710677
        %v805 = vmul.f32 %v638, 0.70710677
        %v806 = vmul.f32 %v640, 0.70710677
        %v807 = vmul.f32 %v642, 0.70710677
        %v808 = vmul.f32 %v646, 0.70710677
        %v809 = vmul.f32 %v648, 0.70710677
        %v810 = vmul.f32 %v650, 0.70710677
        %v811 = vmul.f32 %v652, 0.70710677
        %v812 = vmul.f32 %v656, 0.70710677
        %v813 = vmul.f32 %v658, 0.70710677
        %v814 = vmul.f32 %v660, 0.70710677
        %v815 = vmul.f32 %v662, 0.70710677
        %v816 = vmul.f32 %v666, 0.70710677
        %v817 = vmul.f32 %v668, 0.70710677
        %v818 = vmul.f32 %v670, 0.70710677
        %v819 = vmul.f32 %v672, 0.70710677
        %v820 = vmul.f32 %v676, 0.70710677
        %v821 = vmul.f32 %v678, 0.70710677
        %v822 = vmul.f32 %v680, 0.70710677
        %v823 = vmul.f32 %v682, 0.70710677
        %v824 = vmul.f32 %v686, 0.70710677
        %v825 = vmul.f32 %v688, 0.70710677
        %v826 = vmul.f32 %v690, 0.70710677
        %v827 = vmul.f32 %v692, 0.70710677
        %v828 = vmul.f32 %v696, 0.70710677
        %v829 = vmul.f32 %v698, 0.70710677
        %v830 = vmul.f32 %v700, 0.70710677
        %v831 = vmul.f32 %v702, 0.70710677
        %v832 = verf.f32.pop %v768
        %v833 = verf.f32.pop %v769
        %v834 = verf.f32.pop %v770
        %v835 = verf.f32.pop %v771
        %v836 = verf.f32.pop %v772
        %v837 = verf.f32.pop %v773
        %v838 = verf.f32.pop %v774
        %v839 = verf.f32.pop %v775
        %v840 = verf.f32.pop %v776
        %v841 = verf.f32.pop %v777
        %v842 = verf.f32.pop %v778
        %v843 = verf.f32.pop %v779
        %v844 = verf.f32.pop %v780
        %v845 = verf.f32.pop %v781
        %v846 = verf.f32.pop %v782
        %v847 = verf.f32.pop %v783
        %v848 = verf.f32.pop %v784
        %v849 = verf.f32.pop %v785
        %v850 = verf.f32.pop %v786
        %v851 = verf.f32.pop %v787
        %v852 = verf.f32.pop %v788
        %v853 = verf.f32.pop %v789
        %v854 = verf.f32.pop %v790
        %v855 = verf.f32.pop %v791
        %v856 = verf.f32.pop %v792
        %v857 = verf.f32.pop %v793
        %v858 = verf.f32.pop %v794
        %v859 = verf.f32.pop %v795
        %v860 = verf.f32.pop %v796
        %v861 = verf.f32.pop %v797
        %v862 = verf.f32.pop %v798
        %v863 = verf.f32.pop %v799
        %v864 = verf.f32.pop %v800
        %v865 = verf.f32.pop %v801
        %v866 = verf.f32.pop %v802
        %v867 = verf.f32.pop %v803
        %v868 = verf.f32.pop %v804
        %v869 = verf.f32.pop %v805
        %v870 = verf.f32.pop %v806
        %v871 = verf.f32.pop %v807
        %v872 = verf.f32.pop %v808
        %v873 = verf.f32.pop %v809
        %v874 = verf.f32.pop %v810
        %v875 = verf.f32.pop %v811
        %v876 = verf.f32.pop %v812
        %v877 = verf.f32.pop %v813
        %v878 = verf.f32.pop %v814
        %v879 = verf.f32.pop %v815
        %v880 = verf.f32.pop %v816
        %v881 = verf.f32.pop %v817
        %v882 = verf.f32.pop %v818
        %v883 = verf.f32.pop %v819
        %v884 = verf.f32.pop %v820
        %v885 = verf.f32.pop %v821
        %v886 = verf.f32.pop %v822
        %v887 = verf.f32.pop %v823
        %v888 = verf.f32.pop %v824
        %v889 = verf.f32.pop %v825
        %v890 = verf.f32.pop %v826
        %v891 = verf.f32.pop %v827
        %v892 = verf.f32.pop %v828
        %v893 = verf.f32.pop %v829
        %v894 = verf.f32.pop %v830
        %v895 = verf.f32.pop %v831
        %v896 = vadd.f32 %v832, 1.0
        %v897 = vadd.f32 %v833, 1.0
        %v898 = vadd.f32 %v834, 1.0
        %v899 = vadd.f32 %v835, 1.0
        %v900 = vadd.f32 %v836, 1.0
        %v901 = vadd.f32 %v837, 1.0
        %v902 = vadd.f32 %v838, 1.0
        %v903 = vadd.f32 %v839, 1.0
        %v904 = vadd.f32 %v840, 1.0
        %v905 = vadd.f32 %v841, 1.0
        %v906 = vadd.f32 %v842, 1.0
        %v907 = vadd.f32 %v843, 1.0
        %v908 = vadd.f32 %v844, 1.0
        %v909 = vadd.f32 %v845, 1.0
        %v910 = vadd.f32 %v846, 1.0
        %v911 = vadd.f32 %v847, 1.0
        %v912 = vadd.f32 %v848, 1.0
        %v913 = vadd.f32 %v849, 1.0
        %v914 = vadd.f32 %v850, 1.0
        %v915 = vadd.f32 %v851, 1.0
        %v916 = vadd.f32 %v852, 1.0
        %v917 = vadd.f32 %v853, 1.0
        %v918 = vadd.f32 %v854, 1.0
        %v919 = vadd.f32 %v855, 1.0
        %v920 = vadd.f32 %v856, 1.0
        %v921 = vadd.f32 %v857, 1.0
        %v922 = vadd.f32 %v858, 1.0
        %v923 = vadd.f32 %v859, 1.0
        %v924 = vadd.f32 %v860, 1.0
        %v925 = vadd.f32 %v861, 1.0
        %v926 = vadd.f32 %v862, 1.0
        %v927 = vadd.f32 %v863, 1.0
        %v928 = vadd.f32 %v864, 1.0
        %v929 = vadd.f32 %v865, 1.0
        %v930 = vadd.f32 %v866, 1.0
        %v931 = vadd.f32 %v867, 1.0
        %v932 = vadd.f32 %v868, 1.0
        %v933 = vadd.f32 %v869, 1.0
        %v934 = vadd.f32 %v870, 1.0
        %v935 = vadd.f32 %v871, 1.0
        %v936 = vadd.f32 %v872, 1.0
        %v937 = vadd.f32 %v873, 1.0
        %v938 = vadd.f32 %v874, 1.0
        %v939 = vadd.f32 %v875, 1.0
        %v940 = vadd.f32 %v876, 1.0
        %v941 = vadd.f32 %v877, 1.0
        %v942 = vadd.f32 %v878, 1.0
        %v943 = vadd.f32 %v879, 1.0
        %v944 = vadd.f32 %v880, 1.0
        %v945 = vadd.f32 %v881, 1.0
        %v946 = vadd.f32 %v882, 1.0
        %v947 = vadd.f32 %v883, 1.0
        %v948 = vadd.f32 %v884, 1.0
        %v949 = vadd.f32 %v885, 1.0
        %v950 = vadd.f32 %v886, 1.0
        %v951 = vadd.f32 %v887, 1.0
        %v952 = vadd.f32 %v888, 1.0
        %v953 = vadd.f32 %v889, 1.0
        %v954 = vadd.f32 %v890, 1.0
        %v955 = vadd.f32 %v891, 1.0
        %v956 = vadd.f32 %v892, 1.0
        %v957 = vadd.f32 %v893, 1.0
        %v958 = vadd.f32 %v894, 1.0
        %v959 = vadd.f32 %v895, 1.0
        %v960 = vmul.f32 %v704, %v896
        %v961 = vmul.f32 %v705, %v897
        %v962 = vmul.f32 %v706, %v898
        %v963 = vmul.f32 %v707, %v899
        %v964 = vmul.f32 %v708, %v900
        %v965 = vmul.f32 %v709, %v901
        %v966 = vmul.f32 %v710, %v902
        %v967 = vmul.f32 %v711, %v903
        %v968 = vmul.f32 %v712, %v904
        %v969 = vmul.f32 %v713, %v905
        %v970 = vmul.f32 %v714, %v906
        %v971 = vmul.f32 %v715, %v907
        %v972 = vmul.f32 %v716, %v908
        %v973 = vmul.f32 %v717, %v909
        %v974 = vmul.f32 %v718, %v910
        %v975 = vmul.f32 %v719, %v911
        %v976 = vmul.f32 %v720, %v912
        %v977 = vmul.f32 %v721, %v913
        %v978 = vmul.f32 %v722, %v914
        %v979 = vmul.f32 %v723, %v915
        %v980 = vmul.f32 %v724, %v916
        %v981 = vmul.f32 %v725, %v917
        %v982 = vmul.f32 %v726, %v918
        %v983 = vmul.f32 %v727, %v919
        %v984 = vmul.f32 %v728, %v920
        %v985 = vmul.f32 %v729, %v921
        %v986 = vmul.f32 %v730, %v922
        %v987 = vmul.f32 %v731, %v923
        %v988 = vmul.f32 %v732, %v924
        %v989 = vmul.f32 %v733, %v925
        %v990 = vmul.f32 %v734, %v926
        %v991 = vmul.f32 %v735, %v927
        %v992 = vmul.f32 %v736, %v928
        %v993 = vmul.f32 %v737, %v929
        %v994 = vmul.f32 %v738, %v930
        %v995 = vmul.f32 %v739, %v931
        %v996 = vmul.f32 %v740, %v932
        %v997 = vmul.f32 %v741, %v933
        %v998 = vmul.f32 %v742, %v934
        %v999 = vmul.f32 %v743, %v935
        %v1000 = vmul.f32 %v744, %v936
        %v1001 = vmul.f32 %v745, %v937
        %v1002 = vmul.f32 %v746, %v938
        %v1003 = vmul.f32 %v747, %v939
        %v1004 = vmul.f32 %v748, %v940
        %v1005 = vmul.f32 %v749, %v941
        %v1006 = vmul.f32 %v750, %v942
        %v1007 = vmul.f32 %v751, %v943
        %v1008 = vmul.f32 %v752, %v944
        %v1009 = vmul.f32 %v753, %v945
        %v1010 = vmul.f32 %v754, %v946
        %v1011 = vmul.f32 %v755, %v947
        %v1012 = vmul.f32 %v756, %v948
        %v1013 = vmul.f32 %v757, %v949
        %v1014 = vmul.f32 %v758, %v950
        %v1015 = vmul.f32 %v759, %v951
        %v1016 = vmul.f32 %v760, %v952
        %v1017 = vmul.f32 %v761, %v953
        %v1018 = vmul.f32 %v762, %v954
        %v1019 = vmul.f32 %v763, %v955
        %v1020 = vmul.f32 %v764, %v956
        %v1021 = vmul.f32 %v765, %v957
        %v1022 = vmul.f32 %v766, %v958
        %v1023 = vmul.f32 %v767, %v959
        %v1024 = vpack.c.bf16 %v962, %v960
        %v1025 = vpack.c.bf16 %v963, %v961
        %v1026 = vpack.c.bf16 %v966, %v964
        %v1027 = vpack.c.bf16 %v967, %v965
        %v1028 = vpack.c.bf16 %v970, %v968
        %v1029 = vpack.c.bf16 %v971, %v969
        %v1030 = vpack.c.bf16 %v974, %v972
        %v1031 = vpack.c.bf16 %v975, %v973
        %v1032 = vpack.c.bf16 %v978, %v976
        %v1033 = vpack.c.bf16 %v979, %v977
        %v1034 = vpack.c.bf16 %v982, %v980
        %v1035 = vpack.c.bf16 %v983, %v981
        %v1036 = vpack.c.bf16 %v986, %v984
        %v1037 = vpack.c.bf16 %v987, %v985
        %v1038 = vpack.c.bf16 %v990, %v988
        %v1039 = vpack.c.bf16 %v991, %v989
        %v1040 = vpack.c.bf16 %v994, %v992
        %v1041 = vpack.c.bf16 %v995, %v993
        %v1042 = vpack.c.bf16 %v998, %v996
        %v1043 = vpack.c.bf16 %v999, %v997
        %v1044 = vpack.c.bf16 %v1002, %v1000
        %v1045 = vpack.c.bf16 %v1003, %v1001
        %v1046 = vpack.c.bf16 %v1006, %v1004
        %v1047 = vpack.c.bf16 %v1007, %v1005
        %v1048 = vpack.c.bf16 %v1010, %v1008
        %v1049 = vpack.c.bf16 %v1011, %v1009
        %v1050 = vpack.c.bf16 %v1014, %v1012
        %v1051 = vpack.c.bf16 %v1015, %v1013
        %v1052 = vpack.c.bf16 %v1018, %v1016
        %v1053 = vpack.c.bf16 %v1019, %v1017
        %v1054 = vpack.c.bf16 %v1022, %v1020
        %v1055 = vpack.c.bf16 %v1023, %v1021
        %v1056 = vld [vmem:[#allocation7] sm:$0xf]
        %v1057 = vld [vmem:[#allocation7 + $0x4] sm:$0xf]
        %v1058 = vld [vmem:[#allocation7 + $0x8] sm:$0xf]
        %v1059 = vld [vmem:[#allocation7 + $0xc] sm:$0xf]
        %v1060 = vld [vmem:[#allocation7 + $0x10] sm:$0xf]
        %v1061 = vld [vmem:[#allocation7 + $0x14] sm:$0xf]
        %v1062 = vld [vmem:[#allocation7 + $0x18] sm:$0xf]
        %v1063 = vld [vmem:[#allocation7 + $0x1c] sm:$0xf]
        %v1064 = vld [vmem:[#allocation7 + $0x20] sm:$0xf]
        %v1065 = vld [vmem:[#allocation7 + $0x24] sm:$0xf]
        %v1066 = vld [vmem:[#allocation7 + $0x28] sm:$0xf]
        %v1067 = vld [vmem:[#allocation7 + $0x2c] sm:$0xf]
        %v1068 = vld [vmem:[#allocation7 + $0x30] sm:$0xf]
        %v1069 = vld [vmem:[#allocation7 + $0x34] sm:$0xf]
        %v1070 = vld [vmem:[#allocation7 + $0x38] sm:$0xf]
        %v1071 = vld [vmem:[#allocation7 + $0x3c] sm:$0xf]
        %v1072 = vld [vmem:[#allocation7 + $0x40] sm:$0xf]
        %v1073 = vld [vmem:[#allocation7 + $0x44] sm:$0xf]
        %v1074 = vld [vmem:[#allocation7 + $0x48] sm:$0xf]
        %v1075 = vld [vmem:[#allocation7 + $0x4c] sm:$0xf]
        %v1076 = vld [vmem:[#allocation7 + $0x50] sm:$0xf]
        %v1077 = vld [vmem:[#allocation7 + $0x54] sm:$0xf]
        %v1078 = vld [vmem:[#allocation7 + $0x58] sm:$0xf]
        %v1079 = vld [vmem:[#allocation7 + $0x5c] sm:$0xf]
        %v1080 = vld [vmem:[#allocation7 + $0x60] sm:$0xf]
        %v1081 = vld [vmem:[#allocation7 + $0x64] sm:$0xf]
        %v1082 = vld [vmem:[#allocation7 + $0x68] sm:$0xf]
        %v1083 = vld [vmem:[#allocation7 + $0x6c] sm:$0xf]
        %v1084 = vld [vmem:[#allocation7 + $0x70] sm:$0xf]
        %v1085 = vld [vmem:[#allocation7 + $0x74] sm:$0xf]
        %v1086 = vld [vmem:[#allocation7 + $0x78] sm:$0xf]
        %v1087 = vld [vmem:[#allocation7 + $0x7c] sm:$0xf]
        %v1088 = vld [vmem:[%s4] sm:$0x1]
        %v1090 = vlaneseq
        %v1091 = vshrl.u32 %v1090, 7
        %v1092 = vsub.s32 0, %v1091
        %v1093 = vrot.slane %v1088, %v1092
        %v1127 = vunpack.c.l.b16 %v1056
        %v1128 = vunpack.c.l.b16 %v1057
        %v1129 = vunpack.c.l.b16 %v1058
        %v1130 = vunpack.c.l.b16 %v1059
        %v1131 = vunpack.c.l.b16 %v1060
        %v1132 = vunpack.c.l.b16 %v1061
        %v1133 = vunpack.c.l.b16 %v1062
        %v1134 = vunpack.c.l.b16 %v1063
        %v1135 = vunpack.c.l.b16 %v1064
        %v1136 = vunpack.c.l.b16 %v1065
        %v1137 = vunpack.c.l.b16 %v1066
        %v1138 = vunpack.c.l.b16 %v1067
        %v1139 = vunpack.c.l.b16 %v1068
        %v1140 = vunpack.c.l.b16 %v1069
        %v1141 = vunpack.c.l.b16 %v1070
        %v1142 = vunpack.c.l.b16 %v1071
        %v1143 = vunpack.c.l.b16 %v1072
        %v1144 = vunpack.c.l.b16 %v1073
        %v1145 = vunpack.c.l.b16 %v1074
        %v1146 = vunpack.c.l.b16 %v1075
        %v1147 = vunpack.c.l.b16 %v1076
        %v1148 = vunpack.c.l.b16 %v1077
        %v1149 = vunpack.c.l.b16 %v1078
        %v1150 = vunpack.c.l.b16 %v1079
        %v1151 = vunpack.c.l.b16 %v1080
        %v1152 = vunpack.c.l.b16 %v1081
        %v1153 = vunpack.c.l.b16 %v1082
        %v1154 = vunpack.c.l.b16 %v1083
        %v1155 = vunpack.c.l.b16 %v1084
        %v1156 = vunpack.c.l.b16 %v1085
        %v1157 = vunpack.c.l.b16 %v1086
        %v1158 = vunpack.c.l.b16 %v1087
        %v1159 = vpack.c.b16 %v1128, %v1127
        %v1160 = vpack.c.b16 %v1130, %v1129
        %v1161 = vpack.c.b16 %v1132, %v1131
        %v1162 = vpack.c.b16 %v1134, %v1133
        %v1163 = vpack.c.b16 %v1136, %v1135
        %v1164 = vpack.c.b16 %v1138, %v1137
        %v1165 = vpack.c.b16 %v1140, %v1139
        %v1166 = vpack.c.b16 %v1142, %v1141
        %v1167 = vpack.c.b16 %v1144, %v1143
        %v1168 = vpack.c.b16 %v1146, %v1145
        %v1169 = vpack.c.b16 %v1148, %v1147
        %v1170 = vpack.c.b16 %v1150, %v1149
        %v1171 = vpack.c.b16 %v1152, %v1151
        %v1172 = vpack.c.b16 %v1154, %v1153
        %v1173 = vpack.c.b16 %v1156, %v1155
        %v1174 = vpack.c.b16 %v1158, %v1157
        %1191 = vmatprep.subr.bf16.mxu0 0
        %1192 = vmatpush1.bf16.msra.mxu0 %v1159
        %1193 = vmatprep.subr.bf16.mxu0 0
        %1194 = vmatpush1.bf16.msra.mxu0 %v1160
        %1195 = vmatprep.subr.bf16.mxu0 0
        %1196 = vmatpush1.bf16.msra.mxu0 %v1161
        %1197 = vmatprep.subr.bf16.mxu0 0
        %1198 = vmatpush1.bf16.msra.mxu0 %v1162
        %1199 = vmatprep.subr.bf16.mxu0 0
        %1200 = vmatpush1.bf16.msra.mxu0 %v1163
        %1201 = vmatprep.subr.bf16.mxu0 0
        %1202 = vmatpush1.bf16.msra.mxu0 %v1164
        %1203 = vmatprep.subr.bf16.mxu0 0
        %1204 = vmatpush1.bf16.msra.mxu0 %v1165
        %1205 = vmatprep.subr.bf16.mxu0 0
        %1206 = vmatpush1.bf16.msra.mxu0 %v1166
        %1207 = vmatprep.subr.bf16.mxu0 0
        %1208 = vmatpush1.bf16.msra.mxu0 %v1167
        %1209 = vmatprep.subr.bf16.mxu0 0
        %1210 = vmatpush1.bf16.msra.mxu0 %v1168
        %1211 = vmatprep.subr.bf16.mxu0 0
        %1212 = vmatpush1.bf16.msra.mxu0 %v1169
        %1213 = vmatprep.subr.bf16.mxu0 0
        %1214 = vmatpush1.bf16.msra.mxu0 %v1170
        %1215 = vmatprep.subr.bf16.mxu0 0
        %1216 = vmatpush1.bf16.msra.mxu0 %v1171
        %1217 = vmatprep.subr.bf16.mxu0 0
        %1218 = vmatpush1.bf16.msra.mxu0 %v1172
        %1219 = vmatprep.subr.bf16.mxu0 0
        %1220 = vmatpush1.bf16.msra.mxu0 %v1173
        %1221 = vmatprep.subr.bf16.mxu0 0
        %1222 = vmatpush1.bf16.msra.mxu0 %v1174
        %1223 = vmatprep.mubr.bf16.mxu0 %v1025
        %1224 = vmatmul.mubr.bf16.gmra.mrb[0].mxu0 %v1024
        %v1225 = vpop.f32.mrb[0].mxu0
        %v1226 = vadd.f32 %v1093, %v1225
        %v1227 = vpop.f32.mrb[0].mxu0
        %v1228 = vpop.f32.mrb[0].mxu0
        %v1229 = vadd.f32 %v1093, %v1228
        %v1230 = vpop.f32.mrb[0].mxu0
        %1231 = vmatprep.mubr.bf16.mxu0 %v1027
        %1232 = vmatmul.mubr.bf16.gmra.mrb[0].mxu0 %v1026
        %v1233 = vpop.f32.mrb[0].mxu0
        %v1234 = vadd.f32 %v1093, %v1233
        %v1235 = vpop.f32.mrb[0].mxu0
        %v1236 = vpop.f32.mrb[0].mxu0
        %v1237 = vadd.f32 %v1093, %v1236
        %v1238 = vpop.f32.mrb[0].mxu0
        %1239 = vmatprep.mubr.bf16.mxu0 %v1029
        %1240 = vmatmul.mubr.bf16.gmra.mrb[0].mxu0 %v1028
        %v1241 = vpop.f32.mrb[0].mxu0
        %v1242 = vadd.f32 %v1093, %v1241
        %v1243 = vpop.f32.mrb[0].mxu0
        %v1244 = vpop.f32.mrb[0].mxu0
        %v1245 = vadd.f32 %v1093, %v1244
        %v1246 = vpop.f32.mrb[0].mxu0
        %1247 = vmatprep.mubr.bf16.mxu0 %v1031
        %1248 = vmatmul.mubr.bf16.gmra.mrb[0].mxu0 %v1030
        %v1249 = vpop.f32.mrb[0].mxu0
        %v1250 = vadd.f32 %v1093, %v1249
        %v1251 = vpop.f32.mrb[0].mxu0
        %v1252 = vpop.f32.mrb[0].mxu0
        %v1253 = vadd.f32 %v1093, %v1252
        %v1254 = vpop.f32.mrb[0].mxu0
        %1255 = vmatprep.mubr.bf16.mxu0 %v1033
        %1256 = vmatmul.mubr.bf16.gmra.mrb[0].mxu0 %v1032
        %v1257 = vpop.f32.mrb[0].mxu0
        %v1258 = vadd.f32 %v1093, %v1257
        %v1259 = vpop.f32.mrb[0].mxu0
        %v1260 = vpop.f32.mrb[0].mxu0
        %v1261 = vadd.f32 %v1093, %v1260
        %v1262 = vpop.f32.mrb[0].mxu0
        %1263 = vmatprep.mubr.bf16.mxu0 %v1035
        %1264 = vmatmul.mubr.bf16.gmra.mrb[0].mxu0 %v1034
        %v1265 = vpop.f32.mrb[0].mxu0
        %v1266 = vadd.f32 %v1093, %v1265
        %v1267 = vpop.f32.mrb[0].mxu0
        %v1268 = vpop.f32.mrb[0].mxu0
        %v1269 = vadd.f32 %v1093, %v1268
        %v1270 = vpop.f32.mrb[0].mxu0
        %1271 = vmatprep.mubr.bf16.mxu0 %v1037
        %1272 = vmatmul.mubr.bf16.gmra.mrb[0].mxu0 %v1036
        %v1273 = vpop.f32.mrb[0].mxu0
        %v1274 = vadd.f32 %v1093, %v1273
        %v1275 = vpop.f32.mrb[0].mxu0
        %v1276 = vpop.f32.mrb[0].mxu0
        %v1277 = vadd.f32 %v1093, %v1276
        %v1278 = vpop.f32.mrb[0].mxu0
        %1279 = vmatprep.mubr.bf16.mxu0 %v1039
        %1280 = vmatmul.mubr.bf16.gmra.mrb[0].mxu0 %v1038
        %v1281 = vpop.f32.mrb[0].mxu0
        %v1282 = vadd.f32 %v1093, %v1281
        %v1283 = vpop.f32.mrb[0].mxu0
        %v1284 = vpop.f32.mrb[0].mxu0
        %v1285 = vadd.f32 %v1093, %v1284
        %v1286 = vpop.f32.mrb[0].mxu0
        %1287 = vmatprep.mubr.bf16.mxu0 %v1041
        %1288 = vmatmul.mubr.bf16.gmra.mrb[0].mxu0 %v1040
        %v1289 = vpop.f32.mrb[0].mxu0
        %v1290 = vadd.f32 %v1093, %v1289
        %v1291 = vpop.f32.mrb[0].mxu0
        %v1292 = vpop.f32.mrb[0].mxu0
        %v1293 = vadd.f32 %v1093, %v1292
        %v1294 = vpop.f32.mrb[0].mxu0
        %1295 = vmatprep.mubr.bf16.mxu0 %v1043
        %1296 = vmatmul.mubr.bf16.gmra.mrb[0].mxu0 %v1042
        %v1297 = vpop.f32.mrb[0].mxu0
        %v1298 = vadd.f32 %v1093, %v1297
        %v1299 = vpop.f32.mrb[0].mxu0
        %v1300 = vpop.f32.mrb[0].mxu0
        %v1301 = vadd.f32 %v1093, %v1300
        %v1302 = vpop.f32.mrb[0].mxu0
        %1303 = vmatprep.mubr.bf16.mxu0 %v1045
        %1304 = vmatmul.mubr.bf16.gmra.mrb[0].mxu0 %v1044
        %v1305 = vpop.f32.mrb[0].mxu0
        %v1306 = vadd.f32 %v1093, %v1305
        %v1307 = vpop.f32.mrb[0].mxu0
        %v1308 = vpop.f32.mrb[0].mxu0
        %v1309 = vadd.f32 %v1093, %v1308
        %v1310 = vpop.f32.mrb[0].mxu0
        %1311 = vmatprep.mubr.bf16.mxu0 %v1047
        %1312 = vmatmul.mubr.bf16.gmra.mrb[0].mxu0 %v1046
        %v1313 = vpop.f32.mrb[0].mxu0
        %v1314 = vadd.f32 %v1093, %v1313
        %v1315 = vpop.f32.mrb[0].mxu0
        %v1316 = vpop.f32.mrb[0].mxu0
        %v1317 = vadd.f32 %v1093, %v1316
        %v1318 = vpop.f32.mrb[0].mxu0
        %1319 = vmatprep.mubr.bf16.mxu0 %v1049
        %1320 = vmatmul.mubr.bf16.gmra.mrb[0].mxu0 %v1048
        %v1321 = vpop.f32.mrb[0].mxu0
        %v1322 = vadd.f32 %v1093, %v1321
        %v1323 = vpop.f32.mrb[0].mxu0
        %v1324 = vpop.f32.mrb[0].mxu0
        %v1325 = vadd.f32 %v1093, %v1324
        %v1326 = vpop.f32.mrb[0].mxu0
        %1327 = vmatprep.mubr.bf16.mxu0 %v1051
        %1328 = vmatmul.mubr.bf16.gmra.mrb[0].mxu0 %v1050
        %v1329 = vpop.f32.mrb[0].mxu0
        %v1330 = vadd.f32 %v1093, %v1329
        %v1331 = vpop.f32.mrb[0].mxu0
        %v1332 = vpop.f32.mrb[0].mxu0
        %v1333 = vadd.f32 %v1093, %v1332
        %v1334 = vpop.f32.mrb[0].mxu0
        %1335 = vmatprep.mubr.bf16.mxu0 %v1053
        %1336 = vmatmul.mubr.bf16.gmra.mrb[0].mxu0 %v1052
        %v1337 = vpop.f32.mrb[0].mxu0
        %v1338 = vadd.f32 %v1093, %v1337
        %v1339 = vpop.f32.mrb[0].mxu0
        %v1340 = vpop.f32.mrb[0].mxu0
        %v1341 = vadd.f32 %v1093, %v1340
        %v1342 = vpop.f32.mrb[0].mxu0
        %1343 = vmatprep.mubr.bf16.mxu0 %v1055
        %1344 = vmatmul.mubr.bf16.gmra.mrb[0].mxu0 %v1054
        %v1345 = vpop.f32.mrb[0].mxu0
        %v1346 = vadd.f32 %v1093, %v1345
        %v1347 = vpop.f32.mrb[0].mxu0
        %v1348 = vpop.f32.mrb[0].mxu0
        %v1349 = vadd.f32 %v1093, %v1348
        %v1350 = vpop.f32.mrb[0].mxu0
        %1351 = vdwg.mxu0
        %1352 = vst [vmem:[%s271] sm:$0xff] %v1226
        %1353 = vst [vmem:[%s271 + $0x8] sm:$0xff] %v1229
        %1354 = vst [vmem:[%s271 + $0x10] sm:$0xff] %v1234
        %1355 = vst [vmem:[%s271 + $0x18] sm:$0xff] %v1237
        %1356 = vst [vmem:[%s271 + $0x20] sm:$0xff] %v1242
        %1357 = vst [vmem:[%s271 + $0x28] sm:$0xff] %v1245
        %1358 = vst [vmem:[%s271 + $0x30] sm:$0xff] %v1250
        %1359 = vst [vmem:[%s271 + $0x38] sm:$0xff] %v1253
        %1360 = vst [vmem:[%s271 + $0x40] sm:$0xff] %v1258
        %1361 = vst [vmem:[%s271 + $0x48] sm:$0xff] %v1261
        %1362 = vst [vmem:[%s271 + $0x50] sm:$0xff] %v1266
        %1363 = vst [vmem:[%s271 + $0x58] sm:$0xff] %v1269
        %1364 = vst [vmem:[%s271 + $0x60] sm:$0xff] %v1274
        %1365 = vst [vmem:[%s271 + $0x68] sm:$0xff] %v1277
        %1366 = vst [vmem:[%s271 + $0x70] sm:$0xff] %v1282
        %1367 = vst [vmem:[%s271 + $0x78] sm:$0xff] %v1285
        %1368 = vst [vmem:[%s271 + $0x80] sm:$0xff] %v1290
        %1369 = vst [vmem:[%s271 + $0x88] sm:$0xff] %v1293
        %1370 = vst [vmem:[%s271 + $0x90] sm:$0xff] %v1298
        %1371 = vst [vmem:[%s271 + $0x98] sm:$0xff] %v1301
        %1372 = vst [vmem:[%s271 + $0xa0] sm:$0xff] %v1306
        %1373 = vst [vmem:[%s271 + $0xa8] sm:$0xff] %v1309
        %1374 = vst [vmem:[%s271 + $0xb0] sm:$0xff] %v1314
        %1375 = vst [vmem:[%s271 + $0xb8] sm:$0xff] %v1317
        %1376 = vst [vmem:[%s271 + $0xc0] sm:$0xff] %v1322
        %1377 = vst [vmem:[%s271 + $0xc8] sm:$0xff] %v1325
        %1378 = vst [vmem:[%s271 + $0xd0] sm:$0xff] %v1330
        %1379 = vst [vmem:[%s271 + $0xd8] sm:$0xff] %v1333
        %1380 = vst [vmem:[%s271 + $0xe0] sm:$0xff] %v1338
        %1381 = vst [vmem:[%s271 + $0xe8] sm:$0xff] %v1341
        %1382 = vst [vmem:[%s271 + $0xf0] sm:$0xff] %v1346
        %1383 = vst [vmem:[%s271 + $0xf8] sm:$0xff] %v1349
        %s1384 = sand.u32 %s141, 1
        %s1385 = scalar_lea.sflag [#allocation4], %s1384
        %s1386 = sand.u32 %s141, 1
        %s1387 = smul.addr %s1386, 256
        %s1388 = scalar_lea.vmem [#allocation8], %s1387
        // Predicated region
        $region53: #{tpu_custom_call.1} parent=39 // pred_check
          %p1389 = pneg %p151
        $region54: #{tpu_custom_call.1} parent=39 // pred_check_branch
          %1391 = sbr.rel (%p1389) target = $region56
        $region55: #{tpu_custom_call.1} parent=39 // pred_region
          %s1392 = smul.u32 32, %s23
          %s1394 = ssub.s32 4096, 4096
          %1395 = vsyncadd %s1385, %s1394
          %s1396 = smul.addr %s1392, 128
          %s1397 = scalar_lea.hbm %s5, %s1396
          %s1398 = sshll.u32 %s1388, 4
          %s1399 = int_to_ptr.vmem [resolvable:$true] %s1398
          %1404 = dma.vmem_to_hbm [thread:$0]  %s1399, 4096, %s1397, %s1385, 128, 128, 8
        $region56: #{tpu_custom_call.1} parent=39 // pred_fallthru
          _
      $region40: #{tpu_custom_call.1} parent=5 // pred_fallthru
        _
      %p1405 = scmp.le.s32.totalorder 2, %s18
      // Predicated region
      $region57: #{tpu_custom_call.1} parent=5 // pred_check
        %p1406 = pneg %p1405
      $region58: #{tpu_custom_call.1} parent=5 // pred_check_branch
        %1408 = sbr.rel (%p1406) target = $region60
      $region59: #{tpu_custom_call.1} parent=5 // pred_region
        %s1409 = ssub.s32 %s18, 2
        // Predicated region
        $region61: #{tpu_custom_call.1} parent=59 // pred_check
          %p1410 = pneg %p157
        $region62: #{tpu_custom_call.1} parent=59 // pred_check_branch
          %1412 = sbr.rel (%p1410) target = $region64
        $region63: #{tpu_custom_call.1} parent=59 // pred_region
          %s1413 = sand.u32 %s142, 1
          %s1414 = scalar_lea.sflag [#allocation4], %s1413
          %s1415 = sand.u32 %s142, 1
          %s1416 = smul.addr %s1415, 256
          %s1417 = scalar_lea.vmem [#allocation8], %s1416
          %1418 = dma.done %s1414, 4096
        $region64: #{tpu_custom_call.1} parent=59 // pred_fallthru
          _
      $region60: #{tpu_custom_call.1} parent=5 // pred_fallthru
        _
    $region6: #{tpu_custom_call.1} parent=1 // loop_footer
      %s22 = sadd.s32 1, %s18
    $region7: #{tpu_custom_call.1} parent=1 // loop_footer_branch
      %17 = sbr.rel target = $region3
    $region8: #{tpu_custom_call.1} parent=1 // loop_exit
      _
    %1419 = vsyncpa [#allocation3], 1
    %s1420 = scalar_lea.sflag [#allocation3], 1
    %1421 = vsyncpa %s1420, 1
    %1422 = vsyncpa [#allocation6], 1
    %1423 = vsyncpa [#allocation4], 1
    %s1424 = scalar_lea.sflag [#allocation4], 1
    %1425 = vsyncpa %s1424, 1

</llo_original>
